<compile_context>
chip_gen: v7x
topology: tpu7x:2x2x1
jax: 0.10.0
libtpu: 0.0.40
codegen_flags: <defaults>
</compile_context>

<pallas_src>
import math

import jax
import jax.numpy as jnp
from jax.experimental import pallas as pl
from jax.experimental.pallas import tpu as pltpu


def _round_up(x, m):
    return ((x + m - 1) // m) * m


def _cdiv(a, b):
    return -(-a // b)


def actor_kernel(
    alpha_ref,                       # SMEM (2,): [prelu1_alpha, prelu2_alpha]
    obs_ref, act_ref,                # [TB, obs_dim] f32, [TB, A] f32
    w1_ref, b1_ref,                  # [obs_dim, H] bf16, [1, H] f32
    w2_ref, b2_ref,                  # [H, H] bf16,       [1, H] f32
    w3_ref, b3_ref,                  # [H, A] bf16,       [1, A] f32
    inv2v_ref, cterm_ref,            # [1, A] f32 each
    mu_ref, logp_ref,                # [TB, A] f32, [TB, 1] f32
):
    a1 = alpha_ref[0]
    a2 = alpha_ref[1]

    # Linear 1 (+ Dropout = identity) + PReLU
    x = obs_ref[...].astype(w1_ref.dtype)
    h = jnp.dot(x, w1_ref[...], preferred_element_type=jnp.float32) + b1_ref[...]
    h = jnp.where(h > 0.0, h, a1 * h)

    # Linear 2 (+ Dropout = identity) + PReLU
    h = jnp.dot(h.astype(w2_ref.dtype), w2_ref[...],
                preferred_element_type=jnp.float32) + b2_ref[...]
    h = jnp.where(h > 0.0, h, a2 * h)

    # Linear 3 + Tanh  -> mu  (stored narrow: only the A real lanes)
    mu = jnp.tanh(
        jnp.dot(h.astype(w3_ref.dtype), w3_ref[...],
                preferred_element_type=jnp.float32) + b3_ref[...]
    )
    mu_ref[...] = mu

    # Normal(mu, exp(log_std)).log_prob(act).sum(-1), divide-free.
    d = act_ref[...] - mu
    lp = -(d * d) * inv2v_ref[...] + cterm_ref[...]        # [TB, A]
    logp_ref[...] = jnp.sum(lp, axis=-1, keepdims=True)    # [TB, 1]


def _tile_bytes(rows, cols, itemsize):
    # VMEM layout tile is (8*(4/itemsize), 128): f32 -> (8,128), bf16 -> (16,128).
    sub = 8 * (4 // itemsize)
    return _round_up(rows, sub) * _round_up(cols, 128) * itemsize


def _vmem_bytes(tb, obs_dim, hidden, act_dim):
    """Estimate of double-buffered stream + resident + in-kernel scratch bytes."""
    stream = 2 * (_tile_bytes(tb, obs_dim, 4) + _tile_bytes(tb, act_dim, 4)
                  + _tile_bytes(tb, act_dim, 4) + _tile_bytes(tb, 1, 4))
    resident = 2 * (_tile_bytes(obs_dim, hidden, 2) + _tile_bytes(hidden, hidden, 2)
                    + _tile_bytes(hidden, act_dim, 2)
                    + 2 * _tile_bytes(1, hidden, 4) + 3 * _tile_bytes(1, act_dim, 4))
    # Intermediates (x/h/mu/d ...) that spill to VMEM for large row tiles.
    scratch = 4 * _tile_bytes(tb, max(obs_dim, hidden, act_dim), 4)
    return stream + resident + scratch


def actor_forward(obs, act, params, *, tile_b=2048, matmul_dtype=jnp.bfloat16):
    """Returns (mu, std, log_prob): [B, act_dim], [act_dim], [B]."""
    B, obs_dim = obs.shape
    H = params["w1"].shape[1]
    A = params["w3"].shape[1]

    f32 = jnp.float32
    log_std = params["log_std"].astype(f32)                # (A,)

    # VMEM-resident operands (no lane padding: MXU pads internally).
    w1 = params["w1"].astype(matmul_dtype)
    w2 = params["w2"].astype(matmul_dtype)
    w3 = params["w3"].astype(matmul_dtype)
    b1 = params["b1"].reshape(1, H).astype(f32)
    b2 = params["b2"].reshape(1, H).astype(f32)
    b3 = params["b3"].reshape(1, A).astype(f32)
    inv2v = (0.5 * jnp.exp(-2.0 * log_std)).reshape(1, A)
    cterm = (-log_std - 0.5 * math.log(2.0 * math.pi)).reshape(1, A)
    alpha = jnp.stack([params["a1"], params["a2"]]).astype(f32)   # (2,) -> SMEM

    # --- batch tile sizing ---------------------------------------------------
    TB = min(tile_b, _round_up(B, 8))
    TB = max(8, (TB // 8) * 8)
    # Prefer >= 2 grid steps when possible so the "parallel" axis can shard
    # across both TensorCores on v7x (free throughput there, harmless elsewhere).
    if B >= 16 and _cdiv(B, TB) < 2:
        TB = max(8, _round_up(_cdiv(B, 2), 8))
    # Keep the double-buffered footprint within a v7x-safe VMEM budget.
    VMEM_BUDGET = 24 * 1024 * 1024
    while TB > 8 and _vmem_bytes(TB, obs_dim, H, A) > VMEM_BUDGET:
        TB = max(8, ((TB // 2) // 8) * 8)
    num_tiles = _cdiv(B, TB)
    vmem_limit = int(min(100 * 1024 * 1024,
                         _vmem_bytes(TB, obs_dim, H, A) + 8 * 1024 * 1024))

    def stream(shape):
        return pl.BlockSpec(shape, lambda i, alpha: (i, 0))

    def resident(shape):
        # NOTE: resident blocks are still default double-buffered; with larger H
        # pl.Buffered(1) would reclaim that VMEM, but it is irrelevant here.
        return pl.BlockSpec(shape, lambda i, alpha: (0, 0))

    grid_spec = pltpu.PrefetchScalarGridSpec(
        num_scalar_prefetch=1,
        grid=(num_tiles,),
        in_specs=[
            stream((TB, obs_dim)),       # obs (boundary block clamped, no pad)
            stream((TB, A)),             # act (unpadded, narrow lanes)
            resident((obs_dim, H)),      # w1
            resident((1, H)),            # b1
            resident((H, H)),            # w2
            resident((1, H)),            # b2
            resident((H, A)),            # w3
            resident((1, A)),            # b3
            resident((1, A)),            # 0.5 * exp(-2*log_std)
            resident((1, A)),            # -log_std - 0.5*log(2*pi)
        ],
        out_specs=[
            stream((TB, A)),             # mu       (narrow: exactly A lanes)
            stream((TB, 1)),             # log_prob (single column)
        ],
    )

    mu, logp = pl.pallas_call(
        actor_kernel,
        grid_spec=grid_spec,
        out_shape=(
            jax.ShapeDtypeStruct((B, A), f32),
            jax.ShapeDtypeStruct((B, 1), f32),
        ),
        compiler_params=pltpu.CompilerParams(
            dimension_semantics=("parallel",),
            vmem_limit_bytes=vmem_limit,
        ),
    )(alpha, obs.astype(f32), act.astype(f32),
      w1, b1, w2, b2, w3, b3, inv2v, cterm)

    std = jnp.exp(log_std)
    log_prob = logp[:, 0]
    return mu, std, log_prob


def init_params(key, obs_dim, hidden_dim, act_dim):
    ks = jax.random.split(key, 6)

    def linear(kw, kb, fan_in, fan_out):
        # PyTorch default Linear init: U(-1/sqrt(fan_in), 1/sqrt(fan_in))
        bound = 1.0 / math.sqrt(fan_in)
        w = jax.random.uniform(kw, (fan_in, fan_out), jnp.float32, -bound, bound)
        b = jax.random.uniform(kb, (fan_out,), jnp.float32, -bound, bound)
        return w, b

    w1, b1 = linear(ks[0], ks[1], obs_dim, hidden_dim)
    w2, b2 = linear(ks[2], ks[3], hidden_dim, hidden_dim)
    w3, b3 = linear(ks[4], ks[5], hidden_dim, act_dim)
    return {
        "w1": w1, "b1": b1, "a1": jnp.float32(0.25),   # PReLU default init
        "w2": w2, "b2": b2, "a2": jnp.float32(0.25),
        "w3": w3, "b3": b3,
        "log_std": jnp.full((act_dim,), -0.5, jnp.float32),
    }


if __name__ == "__main__":
    obs_dim, hidden_dim, act_dim = 16, 32, 8
    batch = 8

    key = jax.random.PRNGKey(0)
    k_params, k_obs, k_act = jax.random.split(key, 3)

    params = init_params(k_params, obs_dim, hidden_dim, act_dim)
    obs = jax.random.normal(k_obs, (batch, obs_dim), jnp.float32)
    act = jax.random.normal(k_act, (batch, act_dim), jnp.float32)

    mu, std, log_prob = actor_forward(obs, act, params)
    jax.block_until_ready((mu, std, log_prob))

    # Pure-JAX reference using the same bf16-matmul / f32-accumulate math.
    def ref(obs, act, p, mm_dtype=jnp.bfloat16):
        c = lambda t: t.astype(mm_dtype)
        h = jnp.dot(c(obs), c(p["w1"]), preferred_element_type=jnp.float32) + p["b1"]
        h = jnp.where(h > 0, h, p["a1"] * h)
        h = jnp.dot(c(h), c(p["w2"]), preferred_element_type=jnp.float32) + p["b2"]
        h = jnp.where(h > 0, h, p["a2"] * h)
        mu = jnp.tanh(
            jnp.dot(c(h), c(p["w3"]), preferred_element_type=jnp.float32) + p["b3"])
        log_std = p["log_std"]
        std = jnp.exp(log_std)
        lp = (-((act - mu) ** 2) / (2.0 * std * std)
              - log_std - 0.5 * math.log(2.0 * math.pi))
        return mu, std, lp.sum(-1)

    mu_r, std_r, lp_r = ref(obs, act, params)
    assert mu.shape == (batch, act_dim) and log_prob.shape == (batch,)
    assert jnp.allclose(mu, mu_r, atol=1e-4), "mu mismatch"
    assert jnp.allclose(std, std_r, atol=1e-6), "std mismatch"
    assert jnp.allclose(log_prob, lp_r, atol=1e-4), "log_prob mismatch"

    print("KERNEL_OK")
</pallas_src>

<mosaic_0001>
module attributes {stable_mosaic.version = 11 : i64} {
  func.func @actor_kernel(%arg0: i32, %arg1: memref<2xf32, #tpu.memory_space<smem>>, %arg2: memref<8x16xf32, #tpu.memory_space<vmem>>, %arg3: memref<8x8xf32, #tpu.memory_space<vmem>>, %arg4: memref<16x32xbf16, #tpu.memory_space<vmem>>, %arg5: memref<1x32xf32, #tpu.memory_space<vmem>>, %arg6: memref<32x32xbf16, #tpu.memory_space<vmem>>, %arg7: memref<1x32xf32, #tpu.memory_space<vmem>>, %arg8: memref<32x8xbf16, #tpu.memory_space<vmem>>, %arg9: memref<1x8xf32, #tpu.memory_space<vmem>>, %arg10: memref<1x8xf32, #tpu.memory_space<vmem>>, %arg11: memref<1x8xf32, #tpu.memory_space<vmem>>, %arg12: memref<8x8xf32, #tpu.memory_space<vmem>>, %arg13: memref<8x1xf32, #tpu.memory_space<vmem>>) attributes {dimension_semantics = [#tpu.dimension_semantics<parallel>], iteration_bounds = array<i64: 1>, scalar_prefetch = 1 : i64, scratch_operands = 0 : i64, tpu.core_type = #tpu.core_type<tc>, window_params = [{transform_indices = @transform_0, window_bounds = array<i64: 8, 16>}, {transform_indices = @transform_1, window_bounds = array<i64: 8, 8>}, {pipeline_mode = #tpu.pipeline_mode<synchronous>, transform_indices = @transform_2, window_bounds = array<i64: 16, 32>}, {pipeline_mode = #tpu.pipeline_mode<synchronous>, transform_indices = @transform_3, window_bounds = array<i64: 1, 32>}, {pipeline_mode = #tpu.pipeline_mode<synchronous>, transform_indices = @transform_4, window_bounds = array<i64: 32, 32>}, {pipeline_mode = #tpu.pipeline_mode<synchronous>, transform_indices = @transform_5, window_bounds = array<i64: 1, 32>}, {pipeline_mode = #tpu.pipeline_mode<synchronous>, transform_indices = @transform_6, window_bounds = array<i64: 32, 8>}, {pipeline_mode = #tpu.pipeline_mode<synchronous>, transform_indices = @transform_7, window_bounds = array<i64: 1, 8>}, {pipeline_mode = #tpu.pipeline_mode<synchronous>, transform_indices = @transform_8, window_bounds = array<i64: 1, 8>}, {pipeline_mode = #tpu.pipeline_mode<synchronous>, transform_indices = @transform_9, window_bounds = array<i64: 1, 8>}, {transform_indices = @transform_10, window_bounds = array<i64: 8, 8>}, {transform_indices = @transform_11, window_bounds = array<i64: 8, 1>}]} {
    %c0 = arith.constant 0 : index
    %0 = memref.load %arg1[%c0] : memref<2xf32, #tpu.memory_space<smem>>
    %c1 = arith.constant 1 : index
    %1 = memref.load %arg1[%c1] : memref<2xf32, #tpu.memory_space<smem>>
    %c0_0 = arith.constant 0 : index
    %c0_1 = arith.constant 0 : index
    %2 = vector.load %arg2[%c0_0, %c0_1] : memref<8x16xf32, #tpu.memory_space<vmem>>, vector<8x16xf32>
    %3 = arith.truncf %2 : vector<8x16xf32> to vector<8x16xbf16>
    %c0_2 = arith.constant 0 : index
    %c0_3 = arith.constant 0 : index
    %4 = vector.load %arg4[%c0_2, %c0_3] : memref<16x32xbf16, #tpu.memory_space<vmem>>, vector<16x32xbf16>
    %cst = arith.constant dense<0.000000e+00> : vector<8x32xf32>
    %5 = tpu.matmul %3, %4, %cst {dimension_numbers = #tpu.dot_dimension_numbers<[1], [0], [0], [1], [0, 0, 1, 1], [], []>} : vector<8x16xbf16>, vector<16x32xbf16>, vector<8x32xf32> -> vector<8x32xf32>
    %c0_4 = arith.constant 0 : index
    %c0_5 = arith.constant 0 : index
    %6 = vector.load %arg5[%c0_4, %c0_5] : memref<1x32xf32, #tpu.memory_space<vmem>>, vector<1x32xf32>
    %7 = vector.broadcast %6 : vector<1x32xf32> to vector<8x32xf32>
    %8 = arith.addf %5, %7 : vector<8x32xf32>
    %cst_6 = arith.constant 0.000000e+00 : f32
    %9 = vector.broadcast %cst_6 : f32 to vector<8x32xf32>
    %10 = arith.cmpf ogt, %8, %9 : vector<8x32xf32>
    %11 = vector.broadcast %0 : f32 to vector<8x32xf32>
    %12 = arith.mulf %11, %8 : vector<8x32xf32>
    %13 = arith.select %10, %8, %12 : vector<8x32xi1>, vector<8x32xf32>
    %14 = arith.truncf %13 : vector<8x32xf32> to vector<8x32xbf16>
    %c0_7 = arith.constant 0 : index
    %c0_8 = arith.constant 0 : index
    %15 = vector.load %arg6[%c0_7, %c0_8] : memref<32x32xbf16, #tpu.memory_space<vmem>>, vector<32x32xbf16>
    %cst_9 = arith.constant dense<0.000000e+00> : vector<8x32xf32>
    %16 = tpu.matmul %14, %15, %cst_9 {dimension_numbers = #tpu.dot_dimension_numbers<[1], [0], [0], [1], [0, 0, 1, 1], [], []>} : vector<8x32xbf16>, vector<32x32xbf16>, vector<8x32xf32> -> vector<8x32xf32>
    %c0_10 = arith.constant 0 : index
    %c0_11 = arith.constant 0 : index
    %17 = vector.load %arg7[%c0_10, %c0_11] : memref<1x32xf32, #tpu.memory_space<vmem>>, vector<1x32xf32>
    %18 = vector.broadcast %17 : vector<1x32xf32> to vector<8x32xf32>
    %19 = arith.addf %16, %18 : vector<8x32xf32>
    %cst_12 = arith.constant 0.000000e+00 : f32
    %20 = vector.broadcast %cst_12 : f32 to vector<8x32xf32>
    %21 = arith.cmpf ogt, %19, %20 : vector<8x32xf32>
    %22 = vector.broadcast %1 : f32 to vector<8x32xf32>
    %23 = arith.mulf %22, %19 : vector<8x32xf32>
    %24 = arith.select %21, %19, %23 : vector<8x32xi1>, vector<8x32xf32>
    %25 = arith.truncf %24 : vector<8x32xf32> to vector<8x32xbf16>
    %c0_13 = arith.constant 0 : index
    %c0_14 = arith.constant 0 : index
    %26 = vector.load %arg8[%c0_13, %c0_14] : memref<32x8xbf16, #tpu.memory_space<vmem>>, vector<32x8xbf16>
    %cst_15 = arith.constant dense<0.000000e+00> : vector<8x8xf32>
    %27 = tpu.matmul %25, %26, %cst_15 {dimension_numbers = #tpu.dot_dimension_numbers<[1], [0], [0], [1], [0, 0, 1, 1], [], []>} : vector<8x32xbf16>, vector<32x8xbf16>, vector<8x8xf32> -> vector<8x8xf32>
    %c0_16 = arith.constant 0 : index
    %c0_17 = arith.constant 0 : index
    %28 = vector.load %arg9[%c0_16, %c0_17] : memref<1x8xf32, #tpu.memory_space<vmem>>, vector<1x8xf32>
    %29 = vector.broadcast %28 : vector<1x8xf32> to vector<8x8xf32>
    %30 = arith.addf %27, %29 : vector<8x8xf32>
    %31 = math.tanh %30 : vector<8x8xf32>
    %c0_18 = arith.constant 0 : index
    %c0_19 = arith.constant 0 : index
    %32 = vector.load %arg12[%c0_18, %c0_19] : memref<8x8xf32, #tpu.memory_space<vmem>>, vector<8x8xf32>
    tpu.vector_store %arg12[%c0_18, %c0_19], %31 {strides = array<i32>} : memref<8x8xf32, #tpu.memory_space<vmem>>, vector<8x8xf32>,
    %c0_20 = arith.constant 0 : index
    %c0_21 = arith.constant 0 : index
    %33 = vector.load %arg3[%c0_20, %c0_21] : memref<8x8xf32, #tpu.memory_space<vmem>>, vector<8x8xf32>
    %34 = arith.subf %33, %31 : vector<8x8xf32>
    %35 = arith.mulf %34, %34 : vector<8x8xf32>
    %cst_22 = arith.constant 0.000000e+00 : f32
    %36 = vector.broadcast %cst_22 : f32 to vector<8x8xf32>
    %37 = arith.subf %36, %35 : vector<8x8xf32>
    %c0_23 = arith.constant 0 : index
    %c0_24 = arith.constant 0 : index
    %38 = vector.load %arg10[%c0_23, %c0_24] : memref<1x8xf32, #tpu.memory_space<vmem>>, vector<1x8xf32>
    %39 = vector.broadcast %38 : vector<1x8xf32> to vector<8x8xf32>
    %40 = arith.mulf %37, %39 : vector<8x8xf32>
    %c0_25 = arith.constant 0 : index
    %c0_26 = arith.constant 0 : index
    %41 = vector.load %arg11[%c0_25, %c0_26] : memref<1x8xf32, #tpu.memory_space<vmem>>, vector<1x8xf32>
    %42 = vector.broadcast %41 : vector<1x8xf32> to vector<8x8xf32>
    %43 = arith.addf %40, %42 : vector<8x8xf32>
    %cst_27 = arith.constant dense<0.000000e+00> : vector<8xf32>
    %44 = vector.multi_reduction <add>, %43, %cst_27 [1] : vector<8x8xf32> to vector<8xf32>
    %45 = vector.shape_cast %44 : vector<8xf32> to vector<8x1xf32>
    %c0_28 = arith.constant 0 : index
    %c0_29 = arith.constant 0 : index
    %46 = vector.load %arg13[%c0_28, %c0_29] : memref<8x1xf32, #tpu.memory_space<vmem>>, vector<8x1xf32>
    tpu.vector_store %arg13[%c0_28, %c0_29], %45 {strides = array<i32>} : memref<8x1xf32, #tpu.memory_space<vmem>>, vector<8x1xf32>,
    return
  }
  func.func @transform_0(%arg0: i32, %arg1: memref<2xf32, #tpu.memory_space<smem>>) -> (i32, i32) {
    %c0_i32 = arith.constant 0 : i32
    %c0_i32_0 = arith.constant 0 : i32
    return %arg0, %c0_i32 : i32, i32
  }
  func.func @transform_1(%arg0: i32, %arg1: memref<2xf32, #tpu.memory_space<smem>>) -> (i32, i32) {
    %c0_i32 = arith.constant 0 : i32
    %c0_i32_0 = arith.constant 0 : i32
    return %arg0, %c0_i32 : i32, i32
  }
  func.func @transform_2(%arg0: i32, %arg1: memref<2xf32, #tpu.memory_space<smem>>) -> (i32, i32) {
    %c0_i32 = arith.constant 0 : i32
    %c0_i32_0 = arith.constant 0 : i32
    %c0_i32_1 = arith.constant 0 : i32
    return %c0_i32, %c0_i32_0 : i32, i32
  }
  func.func @transform_3(%arg0: i32, %arg1: memref<2xf32, #tpu.memory_space<smem>>) -> (i32, i32) {
    %c0_i32 = arith.constant 0 : i32
    %c0_i32_0 = arith.constant 0 : i32
    %c0_i32_1 = arith.constant 0 : i32
    return %c0_i32, %c0_i32_0 : i32, i32
  }
  func.func @transform_4(%arg0: i32, %arg1: memref<2xf32, #tpu.memory_space<smem>>) -> (i32, i32) {
    %c0_i32 = arith.constant 0 : i32
    %c0_i32_0 = arith.constant 0 : i32
    %c0_i32_1 = arith.constant 0 : i32
    return %c0_i32, %c0_i32_0 : i32, i32
  }
  func.func @transform_5(%arg0: i32, %arg1: memref<2xf32, #tpu.memory_space<smem>>) -> (i32, i32) {
    %c0_i32 = arith.constant 0 : i32
    %c0_i32_0 = arith.constant 0 : i32
    %c0_i32_1 = arith.constant 0 : i32
    return %c0_i32, %c0_i32_0 : i32, i32
  }
  func.func @transform_6(%arg0: i32, %arg1: memref<2xf32, #tpu.memory_space<smem>>) -> (i32, i32) {
    %c0_i32 = arith.constant 0 : i32
    %c0_i32_0 = arith.constant 0 : i32
    %c0_i32_1 = arith.constant 0 : i32
    return %c0_i32, %c0_i32_0 : i32, i32
  }
  func.func @transform_7(%arg0: i32, %arg1: memref<2xf32, #tpu.memory_space<smem>>) -> (i32, i32) {
    %c0_i32 = arith.constant 0 : i32
    %c0_i32_0 = arith.constant 0 : i32
    %c0_i32_1 = arith.constant 0 : i32
    return %c0_i32, %c0_i32_0 : i32, i32
  }
  func.func @transform_8(%arg0: i32, %arg1: memref<2xf32, #tpu.memory_space<smem>>) -> (i32, i32) {
    %c0_i32 = arith.constant 0 : i32
    %c0_i32_0 = arith.constant 0 : i32
    %c0_i32_1 = arith.constant 0 : i32
    return %c0_i32, %c0_i32_0 : i32, i32
  }
  func.func @transform_9(%arg0: i32, %arg1: memref<2xf32, #tpu.memory_space<smem>>) -> (i32, i32) {
    %c0_i32 = arith.constant 0 : i32
    %c0_i32_0 = arith.constant 0 : i32
    %c0_i32_1 = arith.constant 0 : i32
    return %c0_i32, %c0_i32_0 : i32, i32
  }
  func.func @transform_10(%arg0: i32, %arg1: memref<2xf32, #tpu.memory_space<smem>>) -> (i32, i32) {
    %c0_i32 = arith.constant 0 : i32
    %c0_i32_0 = arith.constant 0 : i32
    return %arg0, %c0_i32 : i32, i32
  }
  func.func @transform_11(%arg0: i32, %arg1: memref<2xf32, #tpu.memory_space<smem>>) -> (i32, i32) {
    %c0_i32 = arith.constant 0 : i32
    %c0_i32_0 = arith.constant 0 : i32
    return %arg0, %c0_i32 : i32, i32
  }
}

</mosaic_0001>

<llo_original>
// kernel: tpu_custom_call.1
$region0: #{tpu_custom_call.1}
  #allocation0 [shape = 'u32[]', space=smem, size = 0x4, offset = 0x4, fixed_abs, tag = 'smem constant byte address 0x4 - core index']
  #allocation1 [shape = 'u32[144,128]{1,0:T(1,128)}', space=vmem, size = 0x12000, scoped, tag = 'internal scratch']
  #allocation2 [shape = 's32[1]{0}', space=sflag, size = 0x4, scoped, tag = 'scoped memory for tpu_custom_call.1']
  #allocation3 [shape = 'u8[512]{0}', space=smem, size = 0x200, scoped, tag = 'prefetched SMEM operand 0']
  %s0 = inlined_call_operand.vmem [shape: f32[2], index: 0, kind: input, shape index: {}]
  %s1 = inlined_call_operand.vmem [shape: f32[8,16], index: 1, kind: input, shape index: {}]
  %s2 = inlined_call_operand.hbm [shape: f32[8,8], index: 2, kind: input, shape index: {}]
  %s3 = inlined_call_operand.hbm [shape: bf16[16,32], index: 3, kind: input, shape index: {}]
  %s4 = inlined_call_operand.vmem [shape: f32[1,32], index: 4, kind: input, shape index: {}]
  %s5 = inlined_call_operand.vmem [shape: bf16[32,32], index: 5, kind: input, shape index: {}]
  %s6 = inlined_call_operand.vmem [shape: f32[1,32], index: 6, kind: input, shape index: {}]
  %s7 = inlined_call_operand.vmem [shape: bf16[32,8], index: 7, kind: input, shape index: {}]
  %s8 = inlined_call_operand.vmem [shape: f32[1,8], index: 8, kind: input, shape index: {}]
  %s9 = inlined_call_operand.vmem [shape: f32[1,8], index: 9, kind: input, shape index: {}]
  %s10 = inlined_call_operand.vmem [shape: f32[1,8], index: 10, kind: input, shape index: {}]
  %s11 = inlined_call_operand.hbm [shape: f32[8,8], index: 11, kind: output, shape index: {0}]
  %s12 = inlined_call_operand.vmem [shape: f32[8,1], index: 12, kind: output, shape index: {1}]
  %13 = xla_tuple %s11, %s12
  %s14 = sld [smem:[#allocation0]]
  $region66: #{tpu_custom_call.1} parent=0
    _
  %s16 = ssub.s32 1, %s14
  %s17 = scalar_select 0, %s16, %s14
  %s18 = sshll.u32 %s0, 4
  %s19 = int_to_ptr.vmem [resolvable:$true] %s18
  %21 = dma.vmem_to_smem %s19, 16, [#allocation3], [#allocation2]
  %22 = dma.done [#allocation2], 16
  %23 = sfence
  $region1: #{tpu_custom_call.1} parent=0
    #allocation4 [shape = 'u8[4096]{0}', space=vmem, size = 0x1000, scoped, tag = 'input window, operand 2, single buffered']
    #allocation5 [shape = 's32[1]{0}', space=sflag, size = 0x4, scoped, tag = 'scoped memory for tpu_custom_call.1']
    #allocation6 [shape = 's32[1]{0}', space=sflag, size = 0x4, scoped, tag = 'scoped memory for tpu_custom_call.1']
    #allocation7 [shape = 'u8[4096]{0}', space=vmem, size = 0x1000, scoped, tag = 'input window, operand 3, single buffered']
    #allocation8 [shape = 's32[1]{0}', space=sflag, size = 0x4, scoped, tag = 'scoped memory for tpu_custom_call.1']
    #allocation9 [shape = 'u8[4096]{0}', space=vmem, size = 0x1000, scoped, tag = 'output window, operand 0, single buffered']
    %24 = vsyncpa [#allocation5], 0
    %25 = vsyncpa [#allocation8], 0
    %26 = vsyncpa [#allocation6], 0
    // Predicated region
    $region2: #{tpu_custom_call.1} parent=1 // pred_check
      _
    $region3: #{tpu_custom_call.1} parent=1 // pred_check_branch
      %28 = sbr.rel (0) target = $region5
    $region4: #{tpu_custom_call.1} parent=1 // pred_region
      _
    $region5: #{tpu_custom_call.1} parent=1 // pred_fallthru
      _
    // Predicated region
    $region6: #{tpu_custom_call.1} parent=1 // pred_check
      _
    $region7: #{tpu_custom_call.1} parent=1 // pred_check_branch
      %30 = sbr.rel (0) target = $region9
    $region8: #{tpu_custom_call.1} parent=1 // pred_region
      %s32 = ssub.s32 128, 128
      %33 = vsyncadd [#allocation5], %s32
      %s35 = sshll.u32 [#allocation4], 4
      %s36 = int_to_ptr.vmem [resolvable:$true] %s35
      %38 = dma.hbm_to_vmem [thread:$0]  %s2, 128, %s36, [#allocation5]
    $region9: #{tpu_custom_call.1} parent=1 // pred_fallthru
      _
    // Predicated region
    $region10: #{tpu_custom_call.1} parent=1 // pred_check
      _
    $region11: #{tpu_custom_call.1} parent=1 // pred_check_branch
      %40 = sbr.rel (0) target = $region13
    $region12: #{tpu_custom_call.1} parent=1 // pred_region
      %s42 = ssub.s32 128, 128
      %43 = vsyncadd [#allocation8], %s42
      %s44 = sshll.u32 [#allocation7], 4
      %s45 = int_to_ptr.vmem [resolvable:$true] %s44
      %50 = dma.hbm_to_vmem [thread:$0]  %s3, 128, %s45, [#allocation8], 64, 64, 4
    $region13: #{tpu_custom_call.1} parent=1 // pred_fallthru
      _
    // Predicated region
    $region14: #{tpu_custom_call.1} parent=1 // pred_check
      _
    $region15: #{tpu_custom_call.1} parent=1 // pred_check_branch
      %52 = sbr.rel (0) target = $region17
    $region16: #{tpu_custom_call.1} parent=1 // pred_region
      _
    $region17: #{tpu_custom_call.1} parent=1 // pred_fallthru
      _
    // Predicated region
    $region18: #{tpu_custom_call.1} parent=1 // pred_check
      _
    $region19: #{tpu_custom_call.1} parent=1 // pred_check_branch
      %54 = sbr.rel (0) target = $region21
    $region20: #{tpu_custom_call.1} parent=1 // pred_region
      _
    $region21: #{tpu_custom_call.1} parent=1 // pred_fallthru
      _
    // Predicated region
    $region22: #{tpu_custom_call.1} parent=1 // pred_check
      _
    $region23: #{tpu_custom_call.1} parent=1 // pred_check_branch
      %56 = sbr.rel (0) target = $region25
    $region24: #{tpu_custom_call.1} parent=1 // pred_region
      _
    $region25: #{tpu_custom_call.1} parent=1 // pred_fallthru
      _
    // Predicated region
    $region26: #{tpu_custom_call.1} parent=1 // pred_check
      _
    $region27: #{tpu_custom_call.1} parent=1 // pred_check_branch
      %58 = sbr.rel (0) target = $region29
    $region28: #{tpu_custom_call.1} parent=1 // pred_region
      _
    $region29: #{tpu_custom_call.1} parent=1 // pred_fallthru
      _
    // Predicated region
    $region30: #{tpu_custom_call.1} parent=1 // pred_check
      _
    $region31: #{tpu_custom_call.1} parent=1 // pred_check_branch
      %60 = sbr.rel (0) target = $region33
    $region32: #{tpu_custom_call.1} parent=1 // pred_region
      _
    $region33: #{tpu_custom_call.1} parent=1 // pred_fallthru
      _
    // Predicated region
    $region34: #{tpu_custom_call.1} parent=1 // pred_check
      _
    $region35: #{tpu_custom_call.1} parent=1 // pred_check_branch
      %62 = sbr.rel (0) target = $region37
    $region36: #{tpu_custom_call.1} parent=1 // pred_region
      _
    $region37: #{tpu_custom_call.1} parent=1 // pred_fallthru
      _
    // Predicated region
    $region38: #{tpu_custom_call.1} parent=1 // pred_check
      _
    $region39: #{tpu_custom_call.1} parent=1 // pred_check_branch
      %64 = sbr.rel (0) target = $region41
    $region40: #{tpu_custom_call.1} parent=1 // pred_region
      _
    $region41: #{tpu_custom_call.1} parent=1 // pred_fallthru
      _
    // Predicated region
    $region42: #{tpu_custom_call.1} parent=1 // pred_check
      _
    $region43: #{tpu_custom_call.1} parent=1 // pred_check_branch
      %66 = sbr.rel (0) target = $region45
    $region44: #{tpu_custom_call.1} parent=1 // pred_region
      %67 = dma.done [#allocation5], 128
    $region45: #{tpu_custom_call.1} parent=1 // pred_fallthru
      _
    // Predicated region
    $region46: #{tpu_custom_call.1} parent=1 // pred_check
      _
    $region47: #{tpu_custom_call.1} parent=1 // pred_check_branch
      %69 = sbr.rel (0) target = $region49
    $region48: #{tpu_custom_call.1} parent=1 // pred_region
      %70 = dma.done [#allocation8], 128
    $region49: #{tpu_custom_call.1} parent=1 // pred_fallthru
      _
    %s72 = sld [smem:[#allocation3]]
    %s73 = sld [smem:[#allocation3 + $0x1]]
    %v74 = vld [vmem:[%s1] sm:$0xff]
    %v75 = vpack.c.bf16 %v74, %v74
    %v76 = vld [vmem:[#allocation7] sm:$0xf]
    %v77 = vld [vmem:[#allocation7 + $0x4] sm:$0xf]
    %v78 = vld [vmem:[%s4] sm:$0x1]
    %v80 = vlaneseq
    %v81 = vshrl.u32 %v80, 7
    %v82 = vsub.s32 0, %v81
    %v83 = vrot.slane %v78, %v82
    %v87 = vunpack.c.l.b16 %v76
    %v88 = vunpack.c.l.b16 %v77
    %v89 = vpack.c.b16 %v88, %v87
    %vm91 = vcmask 130048
    %v93 = vsel %vm91, %v75, 0
    %95 = vmatprep.subr.bf16.mxu0 0
    %96 = vmatpush1.bf16.msra.mxu0 %v89
    %97 = vmatprep.subr.bf16.mxu0 0
    %98 = vmatpush1.bf16.msra.mxu0 0
    %99 = vmatprep.subr.bf16.mxu0 0
    %100 = vmatpush1.bf16.msra.mxu0 0
    %101 = vmatprep.subr.bf16.mxu0 0
    %102 = vmatpush1.bf16.msra.mxu0 0
    %103 = vmatprep.subr.bf16.mxu0 0
    %104 = vmatpush1.bf16.msra.mxu0 0
    %105 = vmatprep.subr.bf16.mxu0 0
    %106 = vmatpush1.bf16.msra.mxu0 0
    %107 = vmatprep.subr.bf16.mxu0 0
    %108 = vmatpush1.bf16.msra.mxu0 0
    %109 = vmatprep.subr.bf16.mxu0 0
    %110 = vmatpush1.bf16.msra.mxu0 0
    %111 = vmatprep.subr.bf16.mxu0 0
    %112 = vmatpush1.bf16.msra.mxu0 0
    %113 = vmatprep.subr.bf16.mxu0 0
    %114 = vmatpush1.bf16.msra.mxu0 0
    %115 = vmatprep.subr.bf16.mxu0 0
    %116 = vmatpush1.bf16.msra.mxu0 0
    %117 = vmatprep.subr.bf16.mxu0 0
    %118 = vmatpush1.bf16.msra.mxu0 0
    %119 = vmatprep.subr.bf16.mxu0 0
    %120 = vmatpush1.bf16.msra.mxu0 0
    %121 = vmatprep.subr.bf16.mxu0 0
    %122 = vmatpush1.bf16.msra.mxu0 0
    %123 = vmatprep.subr.bf16.mxu0 0
    %124 = vmatpush1.bf16.msra.mxu0 0
    %125 = vmatprep.subr.bf16.mxu0 0
    %126 = vmatpush1.bf16.msra.mxu0 0
    %127 = vmatprep.mubr.bf16.mxu0 0
    %128 = vmatmul.mubr.bf16.gmra.mrb[0].mxu0 %v93
    %v129 = vpop.f32.mrb[0].mxu0
    %v130 = vadd.f32 %v83, %v129
    %v131 = vpop.f32.mrb[0].mxu0
    %v132 = vpop.f32.mrb[0].mxu0
    %v133 = vpop.f32.mrb[0].mxu0
    %134 = vdwg.mxu0
    %vm135 = vcmp.gt.f32.partialorder %v130, 0.0
    %v136 = vstv %s72
    %v137 = vmul.f32 %v136, %v130
    %v138 = vsel %vm135, %v130, %v137
    %v139 = vpack.c.bf16 %v138, %v138
    %v140 = vld [vmem:[%s5] sm:$0xf]
    %v141 = vld [vmem:[%s5 + $0x4] sm:$0xf]
    %v142 = vld [vmem:[%s5 + $0x8] sm:$0xf]
    %v143 = vld [vmem:[%s5 + $0xc] sm:$0xf]
    %v144 = vld [vmem:[%s6] sm:$0x1]
    %v146 = vlaneseq
    %v147 = vshrl.u32 %v146, 7
    %v148 = vsub.s32 0, %v147
    %v149 = vrot.slane %v144, %v148
    %v155 = vunpack.c.l.b16 %v140
    %v156 = vunpack.c.l.b16 %v141
    %v157 = vunpack.c.l.b16 %v142
    %v158 = vunpack.c.l.b16 %v143
    %v159 = vpack.c.b16 %v156, %v155
    %v160 = vpack.c.b16 %v158, %v157
    %vm163 = vcmask 261120
    %v165 = vsel %vm163, %v139, 0
    %167 = vmatprep.subr.bf16.mxu0 0
    %168 = vmatpush1.bf16.msra.mxu0 %v159
    %169 = vmatprep.subr.bf16.mxu0 0
    %170 = vmatpush1.bf16.msra.mxu0 %v160
    %171 = vmatprep.subr.bf16.mxu0 0
    %172 = vmatpush1.bf16.msra.mxu0 0
    %173 = vmatprep.subr.bf16.mxu0 0
    %174 = vmatpush1.bf16.msra.mxu0 0
    %175 = vmatprep.subr.bf16.mxu0 0
    %176 = vmatpush1.bf16.msra.mxu0 0
    %177 = vmatprep.subr.bf16.mxu0 0
    %178 = vmatpush1.bf16.msra.mxu0 0
    %179 = vmatprep.subr.bf16.mxu0 0
    %180 = vmatpush1.bf16.msra.mxu0 0
    %181 = vmatprep.subr.bf16.mxu0 0
    %182 = vmatpush1.bf16.msra.mxu0 0
    %183 = vmatprep.subr.bf16.mxu0 0
    %184 = vmatpush1.bf16.msra.mxu0 0
    %185 = vmatprep.subr.bf16.mxu0 0
    %186 = vmatpush1.bf16.msra.mxu0 0
    %187 = vmatprep.subr.bf16.mxu0 0
    %188 = vmatpush1.bf16.msra.mxu0 0
    %189 = vmatprep.subr.bf16.mxu0 0
    %190 = vmatpush1.bf16.msra.mxu0 0
    %191 = vmatprep.subr.bf16.mxu0 0
    %192 = vmatpush1.bf16.msra.mxu0 0
    %193 = vmatprep.subr.bf16.mxu0 0
    %194 = vmatpush1.bf16.msra.mxu0 0
    %195 = vmatprep.subr.bf16.mxu0 0
    %196 = vmatpush1.bf16.msra.mxu0 0
    %197 = vmatprep.subr.bf16.mxu0 0
    %198 = vmatpush1.bf16.msra.mxu0 0
    %199 = vmatprep.mubr.bf16.mxu0 0
    %200 = vmatmul.mubr.bf16.gmra.mrb[0].mxu0 %v165
    %v201 = vpop.f32.mrb[0].mxu0
    %v202 = vadd.f32 %v149, %v201
    %v203 = vpop.f32.mrb[0].mxu0
    %v204 = vpop.f32.mrb[0].mxu0
    %v205 = vpop.f32.mrb[0].mxu0
    %206 = vdwg.mxu0
    %vm207 = vcmp.gt.f32.partialorder %v202, 0.0
    %v208 = vstv %s73
    %v209 = vmul.f32 %v208, %v202
    %v210 = vsel %vm207, %v202, %v209
    %v211 = vpack.c.bf16 %v210, %v210
    %v212 = vld [vmem:[%s7] sm:$0xf]
    %v213 = vld [vmem:[%s7 + $0x4] sm:$0xf]
    %v214 = vld [vmem:[%s7 + $0x8] sm:$0xf]
    %v215 = vld [vmem:[%s7 + $0xc] sm:$0xf]
    %v216 = vld [vmem:[%s8] sm:$0x1]
    %v218 = vlaneseq
    %v219 = vshrl.u32 %v218, 7
    %v220 = vsub.s32 0, %v219
    %v221 = vrot.slane %v216, %v220
    %v227 = vunpack.c.l.b16 %v212
    %v228 = vunpack.c.l.b16 %v213
    %v229 = vunpack.c.l.b16 %v214
    %v230 = vunpack.c.l.b16 %v215
    %v231 = vpack.c.b16 %v228, %v227
    %v232 = vpack.c.b16 %v230, %v229
    %v236 = vsel %vm163, %v211, 0
    %238 = vmatprep.subr.bf16.mxu0 0
    %239 = vmatpush1.bf16.msra.mxu0 %v231
    %240 = vmatprep.subr.bf16.mxu0 0
    %241 = vmatpush1.bf16.msra.mxu0 %v232
    %242 = vmatprep.subr.bf16.mxu0 0
    %243 = vmatpush1.bf16.msra.mxu0 0
    %244 = vmatprep.subr.bf16.mxu0 0
    %245 = vmatpush1.bf16.msra.mxu0 0
    %246 = vmatprep.subr.bf16.mxu0 0
    %247 = vmatpush1.bf16.msra.mxu0 0
    %248 = vmatprep.subr.bf16.mxu0 0
    %249 = vmatpush1.bf16.msra.mxu0 0
    %250 = vmatprep.subr.bf16.mxu0 0
    %251 = vmatpush1.bf16.msra.mxu0 0
    %252 = vmatprep.subr.bf16.mxu0 0
    %253 = vmatpush1.bf16.msra.mxu0 0
    %254 = vmatprep.subr.bf16.mxu0 0
    %255 = vmatpush1.bf16.msra.mxu0 0
    %256 = vmatprep.subr.bf16.mxu0 0
    %257 = vmatpush1.bf16.msra.mxu0 0
    %258 = vmatprep.subr.bf16.mxu0 0
    %259 = vmatpush1.bf16.msra.mxu0 0
    %260 = vmatprep.subr.bf16.mxu0 0
    %261 = vmatpush1.bf16.msra.mxu0 0
    %262 = vmatprep.subr.bf16.mxu0 0
    %263 = vmatpush1.bf16.msra.mxu0 0
    %264 = vmatprep.subr.bf16.mxu0 0
    %265 = vmatpush1.bf16.msra.mxu0 0
    %266 = vmatprep.subr.bf16.mxu0 0
    %267 = vmatpush1.bf16.msra.mxu0 0
    %268 = vmatprep.subr.bf16.mxu0 0
    %269 = vmatpush1.bf16.msra.mxu0 0
    %270 = vmatprep.mubr.bf16.mxu0 0
    %271 = vmatmul.mubr.bf16.gmra.mrb[0].mxu0 %v236
    %v272 = vpop.f32.mrb[0].mxu0
    %v273 = vadd.f32 %v221, %v272
    %v274 = vpop.f32.mrb[0].mxu0
    %v275 = vpop.f32.mrb[0].mxu0
    %v276 = vpop.f32.mrb[0].mxu0
    %277 = vdwg.mxu0
    %v278 = vtanh.pop %v273
    %vm279 = vcmask 64512
    %280 = vst.msk [vmem:[#allocation9] sm:$0xff] %vm279, %v278
    %v281 = vld [vmem:[#allocation4] sm:$0xff]
    %v282 = vsub.f32 %v281, %v278
    %v283 = vmul.f32 %v282, %v282
    %v284 = vsub.f32 0.0, %v283
    %v285 = vld [vmem:[%s9] sm:$0x1]
    %v287 = vlaneseq
    %v288 = vshrl.u32 %v287, 7
    %v289 = vsub.s32 0, %v288
    %v290 = vrot.slane %v285, %v289
    %v292 = vmul.f32 %v284, %v290
    %v293 = vld [vmem:[%s10] sm:$0x1]
    %v295 = vlaneseq
    %v296 = vshrl.u32 %v295, 7
    %v297 = vsub.s32 0, %v296
    %v298 = vrot.slane %v293, %v297
    %v300 = vadd.f32 %v292, %v298
    %v301 = vsel %vm279, %v300, 0.0
    %302 = vadd.xlane.f32.xlu0 %v301
    %v303 = vpop.xlane.xlu0 %302
    %vm304 = vcmask 7168
    %305 = vst.msk [vmem:[%s12] sm:$0xff] %vm304, %v303
    // Predicated region
    $region50: #{tpu_custom_call.1} parent=1 // pred_check
      _
    $region51: #{tpu_custom_call.1} parent=1 // pred_check_branch
      %307 = sbr.rel (0) target = $region53
    $region52: #{tpu_custom_call.1} parent=1 // pred_region
      %s309 = ssub.s32 128, 128
      %310 = vsyncadd [#allocation6], %s309
      %s312 = sshll.u32 [#allocation9], 4
      %s313 = int_to_ptr.vmem [resolvable:$true] %s312
      %315 = dma.vmem_to_hbm [thread:$0]  %s313, 128, %s11, [#allocation6]
    $region53: #{tpu_custom_call.1} parent=1 // pred_fallthru
      _
    // Predicated region
    $region54: #{tpu_custom_call.1} parent=1 // pred_check
      _
    $region55: #{tpu_custom_call.1} parent=1 // pred_check_branch
      %317 = sbr.rel (0) target = $region57
    $region56: #{tpu_custom_call.1} parent=1 // pred_region
      _
    $region57: #{tpu_custom_call.1} parent=1 // pred_fallthru
      _
    // Predicated region
    $region58: #{tpu_custom_call.1} parent=1 // pred_check
      _
    $region59: #{tpu_custom_call.1} parent=1 // pred_check_branch
      %319 = sbr.rel (0) target = $region61
    $region60: #{tpu_custom_call.1} parent=1 // pred_region
      %320 = dma.done [#allocation6], 128
    $region61: #{tpu_custom_call.1} parent=1 // pred_fallthru
      _
    // Predicated region
    $region62: #{tpu_custom_call.1} parent=1 // pred_check
      _
    $region63: #{tpu_custom_call.1} parent=1 // pred_check_branch
      %322 = sbr.rel (0) target = $region65
    $region64: #{tpu_custom_call.1} parent=1 // pred_region
      _
    $region65: #{tpu_custom_call.1} parent=1 // pred_fallthru
      _
    %323 = vsyncpa [#allocation5], 1
    %324 = vsyncpa [#allocation8], 1
    %325 = vsyncpa [#allocation6], 1

</llo_original>
